<compile_context>
chip_gen: v5e
topology: v5e:2x2
jax: 0.10.0
libtpu: 0.0.40
codegen_flags: <defaults>
</compile_context>

<pallas_src>
import functools
import math

import jax
import jax.numpy as jnp
from jax import lax
from jax.experimental import pallas as pl
from jax.experimental.pallas import tpu as pltpu


# ----------------------------- helpers ---------------------------------------

def _pick_q_tile(T):
    """Largest 'nice' divisor of T (<=256 keeps VMEM comfortable on v7x)."""
    for cand in (256, 128, 64, 32, 16, 8):
        if T % cand == 0:
            return cand
    return T          # odd T: single full-T tile (block == full dims is legal)


def prepare_params(params):
    """One-time weight preprocessing (hoisted out of the per-forward path).

    params:
      wk, wq, wv : (H, hs, C)  per-head nn.Linear weights (out, in), bias=False
      w_proj     : (C, C)      projection weight (out, in)
      b_proj     : (C,)        projection bias
    Returns kernel-ready, pre-transposed weights:
      w_qkv_t : (C, 3C)  columns [0:C]=K, [C:2C]=V, [2C:3C]=Q (head h at h*hs)
      w_proj_t: (C, C)   (in, out)
      b_proj  : (1, C)
    """
    wk, wq, wv = params["wk"], params["wq"], params["wv"]
    H, hs, C = wk.shape
    w_qkv_t = jnp.concatenate(
        [wk.reshape(H * hs, C), wv.reshape(H * hs, C), wq.reshape(H * hs, C)],
        axis=0).T                                            # (C, 3C): [K|V|Q]
    return {
        "w_qkv_t": w_qkv_t,
        "w_proj_t": params["w_proj"].T,                      # (C, C) as (in, out)
        "b_proj": params["b_proj"].reshape(1, C),
        "num_heads": H,
        "head_size": hs,
    }


# ----------------------------- fused kernel ----------------------------------

def _mha_fused_kernel(x_ref, wqkv_ref, wproj_ref, bias_ref, o_ref, kv_ref, *,
                      num_heads, head_size, q_tile, scale):
    """One (batch, q-tile) step: QKV proj -> per-head attention -> fused out proj.

    x_ref    : (1, T, C)   full sequence for this batch element (compute dtype)
    wqkv_ref : (C, 3C)     pre-transposed stacked [K | V | Q] weights (resident)
    wproj_ref: (C, C)      pre-transposed output projection weight (resident)
    bias_ref : (1, C)      output projection bias (resident)
    o_ref    : (1, tq, C)  projected output rows for this q tile (lane-dense)
    kv_ref   : (T, 2C)     VMEM scratch caching [K | V] in compute dtype
    """
    C = num_heads * head_size
    qi = pl.program_id(1)

    # K/V projection once per batch element; cached across the q-tile axis.
    @pl.when(qi == 0)
    def _():
        x_all = x_ref[0]                                          # (T, C)
        kv = jnp.dot(x_all, wqkv_ref[:, :2 * C],
                     preferred_element_type=jnp.float32)          # (T, 2C) f32
        kv_ref[...] = kv.astype(kv_ref.dtype)

    # Q projection for this query tile only.  The softmax scale is folded into
    # q here (tq*C multiplies instead of H*tq*T on the score matrices).
    row0 = pl.multiple_of(qi * q_tile, q_tile)
    xq = x_ref[0, pl.ds(row0, q_tile), :]                         # (tq, C)
    q = jnp.dot(xq, wqkv_ref[:, 2 * C:],
                preferred_element_type=jnp.float32) * scale
    q = q.astype(x_ref.dtype)                                     # MXU operand dtype

    k = kv_ref[:, :C]                                             # (T, C)
    v = kv_ref[:, C:]                                             # (T, C)

    # Per-head attention with the output projection fused: each head's context
    # multiplies w_proj rows [h*hs:(h+1)*hs] and accumulates into one (tq, C)
    # f32 accumulator (no concat, no second kernel, no HBM round trip).
    acc = jnp.zeros((q_tile, C), jnp.float32)
    for h in range(num_heads):                                    # static unroll
        lo, hi = h * head_size, (h + 1) * head_size
        # q @ k^T without an explicit in-kernel transpose (contract last dims).
        s = lax.dot_general(q[:, lo:hi], k[:, lo:hi],
                            (((1,), (1,)), ((), ())),
                            preferred_element_type=jnp.float32)   # (tq, T) f32
        m = jnp.max(s, axis=-1, keepdims=True)
        e = jnp.exp(s - m)                                        # f32 softmax
        denom = jnp.sum(e, axis=-1, keepdims=True)                # (tq, 1)
        ctx = jnp.dot(e.astype(v.dtype), v[:, lo:hi],
                      preferred_element_type=jnp.float32)         # (tq, hs) f32
        ctx = ctx * pl.reciprocal(denom, approx=True)             # EUP slot
        acc = acc + jnp.dot(ctx.astype(wproj_ref.dtype), wproj_ref[lo:hi, :],
                            preferred_element_type=jnp.float32)   # (tq, C)

    # Single lane-dense, full-width store (projection bias folded here).
    o_ref[0] = (acc + bias_ref[...]).astype(o_ref.dtype)


def multi_head_attention(x, prepared, *, q_tile=None):
    """Forward pass equivalent to MultiHeadAttention.forward (eval mode).

    `prepared` comes from prepare_params() (weight prep done once, not per call).
    """
    B, T, C = x.shape
    H, hs = prepared["num_heads"], prepared["head_size"]
    assert H * hs == C
    if q_tile is None or T % q_tile != 0:
        q_tile = _pick_q_tile(T)
    nq = T // q_tile
    scale = C ** (-0.5)   # module scales by n_embd**-0.5 (x's channel dim)

    kernel = functools.partial(_mha_fused_kernel, num_heads=H, head_size=hs,
                               q_tile=q_tile, scale=scale)

    return pl.pallas_call(
        kernel,
        out_shape=jax.ShapeDtypeStruct((B, T, C), x.dtype),
        grid_spec=pltpu.PrefetchScalarGridSpec(
            num_scalar_prefetch=0,
            grid=(B, nq),
            in_specs=[
                # Full sequence per batch element; block index is constant in
                # qi so it is only (re-)fetched when b changes.
                pl.BlockSpec((1, T, C), lambda b, qi: (b, 0, 0)),
                # Grid-invariant weights: whole-array residents in VMEM
                # (single copy -> no double-buffering of the weights).
                pl.BlockSpec(memory_space=pltpu.MemorySpace.VMEM),  # w_qkv_t
                pl.BlockSpec(memory_space=pltpu.MemorySpace.VMEM),  # w_proj_t
                pl.BlockSpec(memory_space=pltpu.MemorySpace.VMEM),  # b_proj
            ],
            out_specs=pl.BlockSpec((1, q_tile, C), lambda b, qi: (b, qi, 0)),
            scratch_shapes=[pltpu.VMEM((T, 2 * C), x.dtype)],       # cached K|V
        ),
        compiler_params=pltpu.CompilerParams(
            # Batch axis: megacore-parallel.  Q-tile axis carries the cached
            # K/V scratch, so it must stay sequential ("arbitrary").
            dimension_semantics=("parallel", "arbitrary"),
            # Above the 16/32 MiB scoped defaults, below v7x's 64 MiB physical.
            vmem_limit_bytes=56 * 1024 * 1024,
        ),
    )(x, prepared["w_qkv_t"], prepared["w_proj_t"], prepared["b_proj"])


# ----------------------------- reference (plain JAX) --------------------------

def reference(x, params):
    B, T, C = x.shape
    wk, wq, wv = params["wk"], params["wq"], params["wv"]
    outs = []
    for h in range(wk.shape[0]):
        k = x @ wk[h].T
        q = x @ wq[h].T
        v = x @ wv[h].T
        wei = (q @ jnp.swapaxes(k, -2, -1)) * (C ** -0.5)
        wei = jax.nn.softmax(wei, axis=-1)
        outs.append(wei @ v)
    cat = jnp.concatenate(outs, axis=-1)
    return cat @ params["w_proj"].T + params["b_proj"]


# ----------------------------- main -------------------------------------------

if __name__ == "__main__":
    # small shapes: batch=2, seq=8, n_embd=32, num_heads=4, head_size=8
    B, T, n_embd = 2, 8, 32
    num_heads, head_size = 4, 8
    assert num_heads * head_size == n_embd

    key = jax.random.PRNGKey(0)
    kx, kk, kq, kv, kpw, kpb = jax.random.split(key, 6)
    x = jax.random.normal(kx, (B, T, n_embd), dtype=jnp.float32)

    # nn.Linear default init: U(-1/sqrt(fan_in), 1/sqrt(fan_in))
    bound = 1.0 / math.sqrt(n_embd)
    params = {
        "wk": jax.random.uniform(kk, (num_heads, head_size, n_embd),
                                 minval=-bound, maxval=bound),
        "wq": jax.random.uniform(kq, (num_heads, head_size, n_embd),
                                 minval=-bound, maxval=bound),
        "wv": jax.random.uniform(kv, (num_heads, head_size, n_embd),
                                 minval=-bound, maxval=bound),
        "w_proj": jax.random.uniform(kpw, (n_embd, n_embd),
                                     minval=-bound, maxval=bound),
        "b_proj": jax.random.uniform(kpb, (n_embd,),
                                     minval=-bound, maxval=bound),
    }

    ref = reference(x, params)

    # f32 path (module default dtype).
    prepared = prepare_params(params)                  # one-time weight prep
    out = jax.block_until_ready(multi_head_attention(x, prepared))
    assert out.shape == (B, T, n_embd)
    # tolerance leaves room for the EUP approximate reciprocal in the softmax
    assert jnp.allclose(out, ref, atol=2e-3, rtol=2e-3), "f32 mismatch vs reference"

    # bf16 path: operands feed the MXU in bf16 (peak-throughput dtype on
    # v6e/v7x); softmax + all accumulation stay f32 inside the kernel.
    x_bf16 = x.astype(jnp.bfloat16)
    prepared_bf16 = prepare_params(
        {k_: v_.astype(jnp.bfloat16) for k_, v_ in params.items()})
    out_bf16 = jax.block_until_ready(multi_head_attention(x_bf16, prepared_bf16))
    assert out_bf16.dtype == jnp.bfloat16
    assert jnp.allclose(out_bf16.astype(jnp.float32), ref, atol=5e-2, rtol=5e-2), \
        "bf16 mismatch vs reference"

    print("KERNEL_OK")
</pallas_src>

<mosaic_0001>
module attributes {stable_mosaic.version = 11 : i64} {
  func.func @_mha_fused_kernel(%arg0: i32, %arg1: i32, %arg2: memref<1x8x32xf32, #tpu.memory_space<vmem>>, %arg3: memref<32x96xf32, #tpu.memory_space<vmem>>, %arg4: memref<32x32xf32, #tpu.memory_space<vmem>>, %arg5: memref<1x32xf32, #tpu.memory_space<vmem>>, %arg6: memref<1x8x32xf32, #tpu.memory_space<vmem>>, %arg7: memref<8x64xf32, #tpu.memory_space<vmem>>) attributes {dimension_semantics = [#tpu.dimension_semantics<parallel>, #tpu.dimension_semantics<arbitrary>], iteration_bounds = array<i64: 2, 1>, scalar_prefetch = 0 : i64, scratch_operands = 1 : i64, tpu.core_type = #tpu.core_type<tc>, window_params = [{transform_indices = @transform_0, window_bounds = array<i64: 1, 8, 32>}, {pipeline_mode = #tpu.pipeline_mode<synchronous>, transform_indices = @transform_1, window_bounds = array<i64: 32, 96>}, {pipeline_mode = #tpu.pipeline_mode<synchronous>, transform_indices = @transform_2, window_bounds = array<i64: 32, 32>}, {pipeline_mode = #tpu.pipeline_mode<synchronous>, transform_indices = @transform_3, window_bounds = array<i64: 1, 32>}, {transform_indices = @transform_4, window_bounds = array<i64: 1, 8, 32>}]} {
    %c0_i32 = arith.constant 0 : i32
    %0 = arith.cmpi eq, %arg1, %c0_i32 : i32
    %1 = arith.extui %0 : i1 to i32
    %c0_i32_0 = arith.constant 0 : i32
    %2 = arith.cmpi ne, %1, %c0_i32_0 : i32
    scf.if %2 {
      %c0_38 = arith.constant 0 : index
      %c0_39 = arith.constant 0 : index
      %c0_40 = arith.constant 0 : index
      %93 = vector.load %arg2[%c0_38, %c0_39, %c0_40] : memref<1x8x32xf32, #tpu.memory_space<vmem>>, vector<1x8x32xf32>
      %94 = vector.shape_cast %93 : vector<1x8x32xf32> to vector<8x32xf32>
      %c0_41 = arith.constant 0 : index
      %c0_42 = arith.constant 0 : index
      %95 = vector.load %arg3[%c0_41, %c0_42] : memref<32x96xf32, #tpu.memory_space<vmem>>, vector<32x64xf32>
      %cst_43 = arith.constant dense<0.000000e+00> : vector<8x64xf32>
      %96 = tpu.matmul %94, %95, %cst_43 {dimension_numbers = #tpu.dot_dimension_numbers<[1], [0], [0], [1], [0, 0, 1, 1], [], []>} : vector<8x32xf32>, vector<32x64xf32>, vector<8x64xf32> -> vector<8x64xf32>
      %c0_44 = arith.constant 0 : index
      %c0_45 = arith.constant 0 : index
      %97 = vector.load %arg7[%c0_44, %c0_45] : memref<8x64xf32, #tpu.memory_space<vmem>>, vector<8x64xf32>
      tpu.vector_store %arg7[%c0_44, %c0_45], %96 {strides = array<i32>} : memref<8x64xf32, #tpu.memory_space<vmem>>, vector<8x64xf32>,
    } else {
    }
    %c8_i32 = arith.constant 8 : i32
    %3 = arith.muli %arg1, %c8_i32 : i32
    %4 = tpu.assume_multiple %3, 8 : i32
    %c0 = arith.constant 0 : index
    %5 = arith.index_cast %4 : i32 to index
    %c0_1 = arith.constant 0 : index
    %6 = vector.load %arg2[%c0, %5, %c0_1] : memref<1x8x32xf32, #tpu.memory_space<vmem>>, vector<1x8x32xf32>
    %7 = vector.shape_cast %6 : vector<1x8x32xf32> to vector<8x32xf32>
    %c0_2 = arith.constant 0 : index
    %c64 = arith.constant 64 : index
    %8 = vector.load %arg3[%c0_2, %c64] : memref<32x96xf32, #tpu.memory_space<vmem>>, vector<32x32xf32>
    %cst = arith.constant dense<0.000000e+00> : vector<8x32xf32>
    %9 = tpu.matmul %7, %8, %cst {dimension_numbers = #tpu.dot_dimension_numbers<[1], [0], [0], [1], [0, 0, 1, 1], [], []>} : vector<8x32xf32>, vector<32x32xf32>, vector<8x32xf32> -> vector<8x32xf32>
    %cst_3 = arith.constant 0.176776692 : f32
    %10 = vector.broadcast %cst_3 : f32 to vector<8x32xf32>
    %11 = arith.mulf %9, %10 : vector<8x32xf32>
    %c0_4 = arith.constant 0 : index
    %c0_5 = arith.constant 0 : index
    %12 = vector.load %arg7[%c0_4, %c0_5] : memref<8x64xf32, #tpu.memory_space<vmem>>, vector<8x32xf32>
    %c0_6 = arith.constant 0 : index
    %c32 = arith.constant 32 : index
    %13 = vector.load %arg7[%c0_6, %c32] : memref<8x64xf32, #tpu.memory_space<vmem>>, vector<8x32xf32>
    %cst_7 = arith.constant 0.000000e+00 : f32
    %14 = vector.broadcast %cst_7 : f32 to vector<8x32xf32>
    %15 = vector.extract_strided_slice %11 {offsets = [0, 0], sizes = [8, 8], strides = [1, 1]} : vector<8x32xf32> to vector<8x8xf32>
    %16 = vector.extract_strided_slice %12 {offsets = [0, 0], sizes = [8, 8], strides = [1, 1]} : vector<8x32xf32> to vector<8x8xf32>
    %cst_8 = arith.constant dense<0.000000e+00> : vector<8x8xf32>
    %17 = tpu.matmul %15, %16, %cst_8 {dimension_numbers = #tpu.dot_dimension_numbers<[1], [1], [0], [0], [0, 0, 1, 0], [], []>} : vector<8x8xf32>, vector<8x8xf32>, vector<8x8xf32> -> vector<8x8xf32>
    %cst_9 = arith.constant dense<0xFF800000> : vector<8xf32>
    %18 = vector.multi_reduction <maximumf>, %17, %cst_9 [1] : vector<8x8xf32> to vector<8xf32>
    %19 = vector.shape_cast %18 : vector<8xf32> to vector<8x1xf32>
    %20 = vector.broadcast %19 : vector<8x1xf32> to vector<8x8xf32>
    %21 = arith.subf %17, %20 : vector<8x8xf32>
    %22 = math.exp %21 : vector<8x8xf32>
    %cst_10 = arith.constant dense<0.000000e+00> : vector<8xf32>
    %23 = vector.multi_reduction <add>, %22, %cst_10 [1] : vector<8x8xf32> to vector<8xf32>
    %24 = vector.shape_cast %23 : vector<8xf32> to vector<8x1xf32>
    %25 = vector.extract_strided_slice %13 {offsets = [0, 0], sizes = [8, 8], strides = [1, 1]} : vector<8x32xf32> to vector<8x8xf32>
    %cst_11 = arith.constant dense<0.000000e+00> : vector<8x8xf32>
    %26 = tpu.matmul %22, %25, %cst_11 {dimension_numbers = #tpu.dot_dimension_numbers<[1], [0], [0], [1], [0, 0, 1, 1], [], []>} : vector<8x8xf32>, vector<8x8xf32>, vector<8x8xf32> -> vector<8x8xf32>
    %27 = tpu.reciprocal %24 {approx = true} : vector<8x1xf32> -> vector<8x1xf32>
    %28 = vector.broadcast %27 : vector<8x1xf32> to vector<8x8xf32>
    %29 = arith.mulf %26, %28 : vector<8x8xf32>
    %c0_12 = arith.constant 0 : index
    %c0_13 = arith.constant 0 : index
    %30 = vector.load %arg4[%c0_12, %c0_13] : memref<32x32xf32, #tpu.memory_space<vmem>>, vector<8x32xf32>
    %cst_14 = arith.constant dense<0.000000e+00> : vector<8x32xf32>
    %31 = tpu.matmul %29, %30, %cst_14 {dimension_numbers = #tpu.dot_dimension_numbers<[1], [0], [0], [1], [0, 0, 1, 1], [], []>} : vector<8x8xf32>, vector<8x32xf32>, vector<8x32xf32> -> vector<8x32xf32>
    %32 = arith.addf %14, %31 : vector<8x32xf32>
    %33 = vector.extract_strided_slice %11 {offsets = [0, 8], sizes = [8, 8], strides = [1, 1]} : vector<8x32xf32> to vector<8x8xf32>
    %34 = vector.extract_strided_slice %12 {offsets = [0, 8], sizes = [8, 8], strides = [1, 1]} : vector<8x32xf32> to vector<8x8xf32>
    %cst_15 = arith.constant dense<0.000000e+00> : vector<8x8xf32>
    %35 = tpu.matmul %33, %34, %cst_15 {dimension_numbers = #tpu.dot_dimension_numbers<[1], [1], [0], [0], [0, 0, 1, 0], [], []>} : vector<8x8xf32>, vector<8x8xf32>, vector<8x8xf32> -> vector<8x8xf32>
    %cst_16 = arith.constant dense<0xFF800000> : vector<8xf32>
    %36 = vector.multi_reduction <maximumf>, %35, %cst_16 [1] : vector<8x8xf32> to vector<8xf32>
    %37 = vector.shape_cast %36 : vector<8xf32> to vector<8x1xf32>
    %38 = vector.broadcast %37 : vector<8x1xf32> to vector<8x8xf32>
    %39 = arith.subf %35, %38 : vector<8x8xf32>
    %40 = math.exp %39 : vector<8x8xf32>
    %cst_17 = arith.constant dense<0.000000e+00> : vector<8xf32>
    %41 = vector.multi_reduction <add>, %40, %cst_17 [1] : vector<8x8xf32> to vector<8xf32>
    %42 = vector.shape_cast %41 : vector<8xf32> to vector<8x1xf32>
    %43 = vector.extract_strided_slice %13 {offsets = [0, 8], sizes = [8, 8], strides = [1, 1]} : vector<8x32xf32> to vector<8x8xf32>
    %cst_18 = arith.constant dense<0.000000e+00> : vector<8x8xf32>
    %44 = tpu.matmul %40, %43, %cst_18 {dimension_numbers = #tpu.dot_dimension_numbers<[1], [0], [0], [1], [0, 0, 1, 1], [], []>} : vector<8x8xf32>, vector<8x8xf32>, vector<8x8xf32> -> vector<8x8xf32>
    %45 = tpu.reciprocal %42 {approx = true} : vector<8x1xf32> -> vector<8x1xf32>
    %46 = vector.broadcast %45 : vector<8x1xf32> to vector<8x8xf32>
    %47 = arith.mulf %44, %46 : vector<8x8xf32>
    %c8 = arith.constant 8 : index
    %c0_19 = arith.constant 0 : index
    %48 = vector.load %arg4[%c8, %c0_19] : memref<32x32xf32, #tpu.memory_space<vmem>>, vector<8x32xf32>
    %cst_20 = arith.constant dense<0.000000e+00> : vector<8x32xf32>
    %49 = tpu.matmul %47, %48, %cst_20 {dimension_numbers = #tpu.dot_dimension_numbers<[1], [0], [0], [1], [0, 0, 1, 1], [], []>} : vector<8x8xf32>, vector<8x32xf32>, vector<8x32xf32> -> vector<8x32xf32>
    %50 = arith.addf %32, %49 : vector<8x32xf32>
    %51 = vector.extract_strided_slice %11 {offsets = [0, 16], sizes = [8, 8], strides = [1, 1]} : vector<8x32xf32> to vector<8x8xf32>
    %52 = vector.extract_strided_slice %12 {offsets = [0, 16], sizes = [8, 8], strides = [1, 1]} : vector<8x32xf32> to vector<8x8xf32>
    %cst_21 = arith.constant dense<0.000000e+00> : vector<8x8xf32>
    %53 = tpu.matmul %51, %52, %cst_21 {dimension_numbers = #tpu.dot_dimension_numbers<[1], [1], [0], [0], [0, 0, 1, 0], [], []>} : vector<8x8xf32>, vector<8x8xf32>, vector<8x8xf32> -> vector<8x8xf32>
    %cst_22 = arith.constant dense<0xFF800000> : vector<8xf32>
    %54 = vector.multi_reduction <maximumf>, %53, %cst_22 [1] : vector<8x8xf32> to vector<8xf32>
    %55 = vector.shape_cast %54 : vector<8xf32> to vector<8x1xf32>
    %56 = vector.broadcast %55 : vector<8x1xf32> to vector<8x8xf32>
    %57 = arith.subf %53, %56 : vector<8x8xf32>
    %58 = math.exp %57 : vector<8x8xf32>
    %cst_23 = arith.constant dense<0.000000e+00> : vector<8xf32>
    %59 = vector.multi_reduction <add>, %58, %cst_23 [1] : vector<8x8xf32> to vector<8xf32>
    %60 = vector.shape_cast %59 : vector<8xf32> to vector<8x1xf32>
    %61 = vector.extract_strided_slice %13 {offsets = [0, 16], sizes = [8, 8], strides = [1, 1]} : vector<8x32xf32> to vector<8x8xf32>
    %cst_24 = arith.constant dense<0.000000e+00> : vector<8x8xf32>
    %62 = tpu.matmul %58, %61, %cst_24 {dimension_numbers = #tpu.dot_dimension_numbers<[1], [0], [0], [1], [0, 0, 1, 1], [], []>} : vector<8x8xf32>, vector<8x8xf32>, vector<8x8xf32> -> vector<8x8xf32>
    %63 = tpu.reciprocal %60 {approx = true} : vector<8x1xf32> -> vector<8x1xf32>
    %64 = vector.broadcast %63 : vector<8x1xf32> to vector<8x8xf32>
    %65 = arith.mulf %62, %64 : vector<8x8xf32>
    %c16 = arith.constant 16 : index
    %c0_25 = arith.constant 0 : index
    %66 = vector.load %arg4[%c16, %c0_25] : memref<32x32xf32, #tpu.memory_space<vmem>>, vector<8x32xf32>
    %cst_26 = arith.constant dense<0.000000e+00> : vector<8x32xf32>
    %67 = tpu.matmul %65, %66, %cst_26 {dimension_numbers = #tpu.dot_dimension_numbers<[1], [0], [0], [1], [0, 0, 1, 1], [], []>} : vector<8x8xf32>, vector<8x32xf32>, vector<8x32xf32> -> vector<8x32xf32>
    %68 = arith.addf %50, %67 : vector<8x32xf32>
    %69 = vector.extract_strided_slice %11 {offsets = [0, 24], sizes = [8, 8], strides = [1, 1]} : vector<8x32xf32> to vector<8x8xf32>
    %70 = vector.extract_strided_slice %12 {offsets = [0, 24], sizes = [8, 8], strides = [1, 1]} : vector<8x32xf32> to vector<8x8xf32>
    %cst_27 = arith.constant dense<0.000000e+00> : vector<8x8xf32>
    %71 = tpu.matmul %69, %70, %cst_27 {dimension_numbers = #tpu.dot_dimension_numbers<[1], [1], [0], [0], [0, 0, 1, 0], [], []>} : vector<8x8xf32>, vector<8x8xf32>, vector<8x8xf32> -> vector<8x8xf32>
    %cst_28 = arith.constant dense<0xFF800000> : vector<8xf32>
    %72 = vector.multi_reduction <maximumf>, %71, %cst_28 [1] : vector<8x8xf32> to vector<8xf32>
    %73 = vector.shape_cast %72 : vector<8xf32> to vector<8x1xf32>
    %74 = vector.broadcast %73 : vector<8x1xf32> to vector<8x8xf32>
    %75 = arith.subf %71, %74 : vector<8x8xf32>
    %76 = math.exp %75 : vector<8x8xf32>
    %cst_29 = arith.constant dense<0.000000e+00> : vector<8xf32>
    %77 = vector.multi_reduction <add>, %76, %cst_29 [1] : vector<8x8xf32> to vector<8xf32>
    %78 = vector.shape_cast %77 : vector<8xf32> to vector<8x1xf32>
    %79 = vector.extract_strided_slice %13 {offsets = [0, 24], sizes = [8, 8], strides = [1, 1]} : vector<8x32xf32> to vector<8x8xf32>
    %cst_30 = arith.constant dense<0.000000e+00> : vector<8x8xf32>
    %80 = tpu.matmul %76, %79, %cst_30 {dimension_numbers = #tpu.dot_dimension_numbers<[1], [0], [0], [1], [0, 0, 1, 1], [], []>} : vector<8x8xf32>, vector<8x8xf32>, vector<8x8xf32> -> vector<8x8xf32>
    %81 = tpu.reciprocal %78 {approx = true} : vector<8x1xf32> -> vector<8x1xf32>
    %82 = vector.broadcast %81 : vector<8x1xf32> to vector<8x8xf32>
    %83 = arith.mulf %80, %82 : vector<8x8xf32>
    %c24 = arith.constant 24 : index
    %c0_31 = arith.constant 0 : index
    %84 = vector.load %arg4[%c24, %c0_31] : memref<32x32xf32, #tpu.memory_space<vmem>>, vector<8x32xf32>
    %cst_32 = arith.constant dense<0.000000e+00> : vector<8x32xf32>
    %85 = tpu.matmul %83, %84, %cst_32 {dimension_numbers = #tpu.dot_dimension_numbers<[1], [0], [0], [1], [0, 0, 1, 1], [], []>} : vector<8x8xf32>, vector<8x32xf32>, vector<8x32xf32> -> vector<8x32xf32>
    %86 = arith.addf %68, %85 : vector<8x32xf32>
    %c0_33 = arith.constant 0 : index
    %c0_34 = arith.constant 0 : index
    %87 = vector.load %arg5[%c0_33, %c0_34] : memref<1x32xf32, #tpu.memory_space<vmem>>, vector<1x32xf32>
    %88 = vector.broadcast %87 : vector<1x32xf32> to vector<8x32xf32>
    %89 = arith.addf %86, %88 : vector<8x32xf32>
    %c0_35 = arith.constant 0 : index
    %c0_36 = arith.constant 0 : index
    %c0_37 = arith.constant 0 : index
    %90 = vector.load %arg6[%c0_35, %c0_36, %c0_37] : memref<1x8x32xf32, #tpu.memory_space<vmem>>, vector<1x8x32xf32>
    %91 = vector.shape_cast %90 : vector<1x8x32xf32> to vector<8x32xf32>
    %92 = vector.shape_cast %89 : vector<8x32xf32> to vector<1x8x32xf32>
    tpu.vector_store %arg6[%c0_35, %c0_36, %c0_37], %92 {strides = array<i32>} : memref<1x8x32xf32, #tpu.memory_space<vmem>>, vector<1x8x32xf32>,
    return
  }
  func.func @transform_0(%arg0: i32, %arg1: i32) -> (i32, i32, i32) {
    %c0_i32 = arith.constant 0 : i32
    %c0_i32_0 = arith.constant 0 : i32
    %c0_i32_1 = arith.constant 0 : i32
    return %arg0, %c0_i32, %c0_i32_0 : i32, i32, i32
  }
  func.func @transform_1(%arg0: i32, %arg1: i32) -> (i32, i32) {
    %c0_i32 = arith.constant 0 : i32
    %c0_i32_0 = arith.constant 0 : i32
    %c0_i32_1 = arith.constant 0 : i32
    return %c0_i32, %c0_i32_0 : i32, i32
  }
  func.func @transform_2(%arg0: i32, %arg1: i32) -> (i32, i32) {
    %c0_i32 = arith.constant 0 : i32
    %c0_i32_0 = arith.constant 0 : i32
    %c0_i32_1 = arith.constant 0 : i32
    return %c0_i32, %c0_i32_0 : i32, i32
  }
  func.func @transform_3(%arg0: i32, %arg1: i32) -> (i32, i32) {
    %c0_i32 = arith.constant 0 : i32
    %c0_i32_0 = arith.constant 0 : i32
    %c0_i32_1 = arith.constant 0 : i32
    return %c0_i32, %c0_i32_0 : i32, i32
  }
  func.func @transform_4(%arg0: i32, %arg1: i32) -> (i32, i32, i32) {
    %c0_i32 = arith.constant 0 : i32
    %c0_i32_0 = arith.constant 0 : i32
    return %arg0, %arg1, %c0_i32 : i32, i32, i32
  }
}

</mosaic_0001>

<llo_original>
// kernel: tpu_custom_call.1
$region0: #{tpu_custom_call.1}
  #allocation0 [shape = 'u32[]', space=smem, size = 0x4, offset = 0x4, fixed_abs, tag = 'smem constant byte address 0x4 - core index']
  #allocation1 [shape = 'u32[72,128]{1,0:T(1,128)}', space=vmem, size = 0x9000, scoped, tag = 'internal scratch']
  #allocation2 [shape = 'f32[8,64]{1,0:T(8,128)}', space=vmem, size = 0x1000, scoped, tag = 'scratch operand']
  %s0 = inlined_call_operand.hbm [shape: f32[2,8,32], index: 0, kind: input, shape index: {}]
  %s1 = inlined_call_operand.hbm [shape: f32[32,96], index: 1, kind: input, shape index: {}]
  %s2 = inlined_call_operand.hbm [shape: f32[32,32], index: 2, kind: input, shape index: {}]
  %s3 = inlined_call_operand.vmem [shape: f32[1,32], index: 3, kind: input, shape index: {}]
  %s4 = inlined_call_operand.hbm [shape: f32[2,8,32], index: 4, kind: output, shape index: {}]
  %s5 = sld [smem:[#allocation0]]
  $region65: #{tpu_custom_call.1} parent=0
    _
  %s7 = ssub.s32 1, %s5
  %s8 = scalar_select 0, %s7, %s5
  $region1: #{tpu_custom_call.1} parent=0
    #allocation3 [shape = 'u8[8192]{0}', space=vmem, size = 0x2000, scoped, tag = 'input window, operand 0']
    #allocation4 [shape = 's32[2]{0}', space=sflag, size = 0x8, scoped, tag = 'scoped memory for tpu_custom_call.1']
    #allocation5 [shape = 's32[2]{0}', space=sflag, size = 0x8, scoped, tag = 'scoped memory for tpu_custom_call.1']
    #allocation6 [shape = 'u8[16384]{0}', space=vmem, size = 0x4000, scoped, tag = 'input window, operand 1, single buffered']
    #allocation7 [shape = 's32[1]{0}', space=sflag, size = 0x4, scoped, tag = 'scoped memory for tpu_custom_call.1']
    #allocation8 [shape = 'u8[16384]{0}', space=vmem, size = 0x4000, scoped, tag = 'input window, operand 2, single buffered']
    #allocation9 [shape = 'u8[8192]{0}', space=vmem, size = 0x2000, scoped, tag = 'output window, operand 0']
    %9 = vsyncpa [#allocation4], 0
    %s10 = scalar_lea.sflag [#allocation4], 1
    %11 = vsyncpa %s10, 0
    %12 = vsyncpa [#allocation7], 0
    %13 = vsyncpa [#allocation5], 0
    %s14 = scalar_lea.sflag [#allocation5], 1
    %15 = vsyncpa %s14, 0
    loop: start=0, step=1, limit=4
    $region2: #{tpu_custom_call.1} parent=1 // loop_pre_header
      _
    $region3: #{tpu_custom_call.1} parent=1 // loop_header
      %s17 = sphi 0, %s21
      %p18 = scmp.ge.s32.totalorder %s17, 4
      %s24 = sphi 0, %s36
      %s25 = sphi 0, %s32
      %s26 = sphi 0, %s24
      %s27 = sphi 0, %s25
      %s28 = sphi 0, %s26
      %s29 = sphi 0, %s27
      %s39 = sphi 0, %s41
      %s42 = sphi 0, %s39
      %s43 = sphi 0, %s42
      %s59 = sphi 0, %s43
      %s63 = sphi 0, %s63
      %s65 = sphi 0, %s63
      %s66 = sphi 0, %s65
      %s80 = sphi 0, %s66
      %s84 = sphi 0, %s84
      %s86 = sphi 0, %s84
      %s87 = sphi 0, %s86
      %s101 = sphi 0, %s87
      %s105 = sphi 0, %s105
      %s107 = sphi 0, %s105
      %s108 = sphi 0, %s107
      %s122 = sphi 0, %s108
      %s130 = sphi 0, %s132
      %s133 = sphi 0, %s130
      %s134 = sphi 0, %s133
      %s150 = sphi 0, %s134
    $region4: #{tpu_custom_call.1} parent=1 // loop_header_branch
      %20 = sbr.rel (%p18) target = $region8
    $region5: #{tpu_custom_call.1} parent=1 // loop_body
      %s22 = ssub.s32 %s17, 1
      %s23 = ssub.s32 %s17, 2
      %s30 = sadd.s32 1, %s25
      %p31 = scmp.ge.s32.totalorder %s30, 1
      %s32 = scalar_select %p31, 0, %s30
      %s33 = sadd.s32 1, %s24
      %s34 = scalar_select %p31, %s33, %s24
      %p35 = scmp.ge.s32.totalorder %s34, 2
      %s36 = scalar_select %p35, 0, %s34
      %s37 = ssub.s32 %s24, %s36
      %p38 = scmp.eq.s32.totalorder %s37, 0
      %s40 = sadd.s32 %s39, 1
      %s41 = scalar_select %p38, %s39, %s40
      %p44 = pneg %p38
      %p45 = scmp.eq.s32.totalorder %s17, 1
      %p46 = por %p44, %p45
      %p47 = scmp.ne.s32.totalorder %s39, %s42
      %p48 = scmp.eq.s32.totalorder %s17, 0
      %p49 = por %p47, %p48
      %p50 = scmp.ne.s32.totalorder %s39, %s42
      %p51 = scmp.eq.s32.totalorder %s22, 1
      %p52 = por %p50, %p51
      %p53 = scmp.ne.s32.totalorder %s42, %s43
      %p54 = scmp.eq.s32.totalorder %s22, 0
      %p55 = por %p53, %p54
      %p56 = scmp.ne.s32.totalorder %s42, %s43
      %p57 = scmp.eq.s32.totalorder %s23, 1
      %p58 = por %p56, %p57
      %p60 = scmp.ne.s32.totalorder %s43, %s59
      %p61 = scmp.eq.s32.totalorder %s23, 0
      %p62 = por %p60, %p61
      %s64 = sadd.s32 %s63, 1
      %p67 = scmp.eq.s32.totalorder %s17, 1
      %p68 = scmp.ne.s32.totalorder %s63, %s65
      %p69 = scmp.eq.s32.totalorder %s17, 0
      %p70 = por %p68, %p69
      %p71 = scmp.ne.s32.totalorder %s63, %s65
      %p72 = scmp.eq.s32.totalorder %s22, 1
      %p73 = por %p71, %p72
      %p74 = scmp.ne.s32.totalorder %s65, %s66
      %p75 = scmp.eq.s32.totalorder %s22, 0
      %p76 = por %p74, %p75
      %p77 = scmp.ne.s32.totalorder %s65, %s66
      %p78 = scmp.eq.s32.totalorder %s23, 1
      %p79 = por %p77, %p78
      %p81 = scmp.ne.s32.totalorder %s66, %s80
      %p82 = scmp.eq.s32.totalorder %s23, 0
      %p83 = por %p81, %p82
      %s85 = sadd.s32 %s84, 1
      %p88 = scmp.eq.s32.totalorder %s17, 1
      %p89 = scmp.ne.s32.totalorder %s84, %s86
      %p90 = scmp.eq.s32.totalorder %s17, 0
      %p91 = por %p89, %p90
      %p92 = scmp.ne.s32.totalorder %s84, %s86
      %p93 = scmp.eq.s32.totalorder %s22, 1
      %p94 = por %p92, %p93
      %p95 = scmp.ne.s32.totalorder %s86, %s87
      %p96 = scmp.eq.s32.totalorder %s22, 0
      %p97 = por %p95, %p96
      %p98 = scmp.ne.s32.totalorder %s86, %s87
      %p99 = scmp.eq.s32.totalorder %s23, 1
      %p100 = por %p98, %p99
      %p102 = scmp.ne.s32.totalorder %s87, %s101
      %p103 = scmp.eq.s32.totalorder %s23, 0
      %p104 = por %p102, %p103
      %s106 = sadd.s32 %s105, 1
      %p109 = scmp.eq.s32.totalorder %s17, 1
      %p110 = scmp.ne.s32.totalorder %s105, %s107
      %p111 = scmp.eq.s32.totalorder %s17, 0
      %p112 = por %p110, %p111
      %p113 = scmp.ne.s32.totalorder %s105, %s107
      %p114 = scmp.eq.s32.totalorder %s22, 1
      %p115 = por %p113, %p114
      %p116 = scmp.ne.s32.totalorder %s107, %s108
      %p117 = scmp.eq.s32.totalorder %s22, 0
      %p118 = por %p116, %p117
      %p119 = scmp.ne.s32.totalorder %s107, %s108
      %p120 = scmp.eq.s32.totalorder %s23, 1
      %p121 = por %p119, %p120
      %p123 = scmp.ne.s32.totalorder %s108, %s122
      %p124 = scmp.eq.s32.totalorder %s23, 0
      %p125 = por %p123, %p124
      %s126 = ssub.s32 %s24, %s36
      %s127 = ssub.s32 %s25, %s32
      %s128 = sor.u32 %s126, %s127
      %p129 = scmp.eq.s32.totalorder %s128, 0
      %s131 = sadd.s32 %s130, 1
      %s132 = scalar_select %p129, %s130, %s131
      %p135 = pneg %p129
      %p136 = scmp.eq.s32.totalorder %s17, 1
      %p137 = por %p135, %p136
      %p138 = scmp.ne.s32.totalorder %s130, %s133
      %p139 = scmp.eq.s32.totalorder %s17, 0
      %p140 = por %p138, %p139
      %p141 = scmp.ne.s32.totalorder %s130, %s133
      %p142 = scmp.eq.s32.totalorder %s22, 1
      %p143 = por %p141, %p142
      %p144 = scmp.ne.s32.totalorder %s133, %s134
      %p145 = scmp.eq.s32.totalorder %s22, 0
      %p146 = por %p144, %p145
      %p147 = scmp.ne.s32.totalorder %s133, %s134
      %p148 = scmp.eq.s32.totalorder %s23, 1
      %p149 = por %p147, %p148
      %p151 = scmp.ne.s32.totalorder %s134, %s150
      %p152 = scmp.eq.s32.totalorder %s23, 0
      %p153 = por %p151, %p152
      %p154 = scmp.le.s32.totalorder 1, %s17
      %p155 = scmp.lt.s32.totalorder %s17, 3
      %p156 = pnand %p154, %p155
      %p157 = pneg %p156
      // Predicated region
      $region9: #{tpu_custom_call.1} parent=5 // pred_check
        _
      $region10: #{tpu_custom_call.1} parent=5 // pred_check_branch
        %159 = sbr.rel (%p156) target = $region12
      $region11: #{tpu_custom_call.1} parent=5 // pred_region
        %s160 = ssub.s32 %s17, 1
        // Predicated region
        $region13: #{tpu_custom_call.1} parent=11 // pred_check
          %p161 = pneg %p76
        $region14: #{tpu_custom_call.1} parent=11 // pred_check_branch
          %163 = sbr.rel (%p161) target = $region16
        $region15: #{tpu_custom_call.1} parent=11 // pred_region
          %165 = vsyncadd [#allocation7], 0
          %s166 = sshll.u32 %s1, 4
          %s167 = int_to_ptr.hbm [resolvable:$true] %s166
          %s168 = sshll.u32 [#allocation6], 4
          %s169 = int_to_ptr.vmem [resolvable:$true] %s168
          %174 = dma.hbm_to_vmem [thread:$0]  %s167, 512, %s169, [#allocation7], 128, 128, 8
        $region16: #{tpu_custom_call.1} parent=11 // pred_fallthru
          _
        // Predicated region
        $region17: #{tpu_custom_call.1} parent=11 // pred_check
          %p175 = pneg %p97
        $region18: #{tpu_custom_call.1} parent=11 // pred_check_branch
          %177 = sbr.rel (%p175) target = $region20
        $region19: #{tpu_custom_call.1} parent=11 // pred_region
          %179 = vsyncadd [#allocation7], 0
          %s180 = sshll.u32 %s2, 4
          %s181 = int_to_ptr.hbm [resolvable:$true] %s180
          %s182 = sshll.u32 [#allocation8], 4
          %s183 = int_to_ptr.vmem [resolvable:$true] %s182
          %188 = dma.hbm_to_vmem [thread:$0]  %s181, 512, %s183, [#allocation7], 128, 128, 8
        $region20: #{tpu_custom_call.1} parent=11 // pred_fallthru
          _
        // Predicated region
        $region21: #{tpu_custom_call.1} parent=11 // pred_check
          %p189 = pneg %p118
        $region22: #{tpu_custom_call.1} parent=11 // pred_check_branch
          %191 = sbr.rel (%p189) target = $region24
        $region23: #{tpu_custom_call.1} parent=11 // pred_region
          _
        $region24: #{tpu_custom_call.1} parent=11 // pred_fallthru
          _
      $region12: #{tpu_custom_call.1} parent=5 // pred_fallthru
        _
      %p192 = scmp.lt.s32.totalorder %s17, 2
      // Predicated region
      $region25: #{tpu_custom_call.1} parent=5 // pred_check
        %p193 = pneg %p192
      $region26: #{tpu_custom_call.1} parent=5 // pred_check_branch
        %195 = sbr.rel (%p193) target = $region28
      $region27: #{tpu_custom_call.1} parent=5 // pred_region
        // Predicated region
        $region29: #{tpu_custom_call.1} parent=27 // pred_check
          %p196 = pneg %p49
        $region30: #{tpu_custom_call.1} parent=27 // pred_check_branch
          %198 = sbr.rel (%p196) target = $region32
        $region31: #{tpu_custom_call.1} parent=27 // pred_region
          %s199 = sand.u32 %s39, 1
          %s200 = scalar_lea.sflag [#allocation4], %s199
          %s201 = sand.u32 %s39, 1
          %s202 = smul.addr %s201, 8
          %s203 = scalar_lea.vmem [#allocation3], %s202
          %205 = vsyncadd %s200, 0
          %s206 = smul.addr %s24, 8
          %s207 = scalar_lea.hbm %s0, %s206
          %s209 = sshll.u32 %s207, 4
          %s210 = int_to_ptr.hbm [resolvable:$true] %s209
          %s211 = sshll.u32 %s203, 4
          %s212 = int_to_ptr.vmem [resolvable:$true] %s211
          %214 = dma.hbm_to_vmem [thread:$0]  %s210, 128, %s212, %s200
        $region32: #{tpu_custom_call.1} parent=27 // pred_fallthru
          _
      $region28: #{tpu_custom_call.1} parent=5 // pred_fallthru
        _
      %p215 = scmp.le.s32.totalorder 1, %s17
      %p216 = scmp.lt.s32.totalorder %s17, 3
      %p217 = pnand %p215, %p216
      %p218 = pneg %p217
      // Predicated region
      $region33: #{tpu_custom_call.1} parent=5 // pred_check
        _
      $region34: #{tpu_custom_call.1} parent=5 // pred_check_branch
        %220 = sbr.rel (%p217) target = $region36
      $region35: #{tpu_custom_call.1} parent=5 // pred_region
        %s221 = ssub.s32 %s17, 1
        %s222 = sand.u32 %s42, 1
        %s223 = scalar_lea.sflag [#allocation4], %s222
        %s224 = sand.u32 %s42, 1
        %s225 = smul.addr %s224, 8
        %s226 = scalar_lea.vmem [#allocation3], %s225
        // Predicated region
        $region37: #{tpu_custom_call.1} parent=35 // pred_check
          %p227 = pneg %p55
        $region38: #{tpu_custom_call.1} parent=35 // pred_check_branch
          %229 = sbr.rel (%p227) target = $region40
        $region39: #{tpu_custom_call.1} parent=35 // pred_region
          %231 = dma.done %s223, 128
        $region40: #{tpu_custom_call.1} parent=35 // pred_fallthru
          _
        // Predicated region
        $region41: #{tpu_custom_call.1} parent=35 // pred_check
          %p232 = pneg %p76
        $region42: #{tpu_custom_call.1} parent=35 // pred_check_branch
          %234 = sbr.rel (%p232) target = $region44
        $region43: #{tpu_custom_call.1} parent=35 // pred_region
          %236 = dma.done [#allocation7], 512
        $region44: #{tpu_custom_call.1} parent=35 // pred_fallthru
          _
        // Predicated region
        $region45: #{tpu_custom_call.1} parent=35 // pred_check
          %p237 = pneg %p97
        $region46: #{tpu_custom_call.1} parent=35 // pred_check_branch
          %239 = sbr.rel (%p237) target = $region48
        $region47: #{tpu_custom_call.1} parent=35 // pred_region
          %241 = dma.done [#allocation7], 512
        $region48: #{tpu_custom_call.1} parent=35 // pred_fallthru
          _
        %s242 = sand.u32 %s42, 1
        %s243 = scalar_lea.sflag [#allocation4], %s242
        %s244 = sand.u32 %s42, 1
        %s245 = smul.addr %s244, 8
        %s246 = scalar_lea.vmem [#allocation3], %s245
        %p247 = pneg %p55
        %p248 = pneg %p52
        %p249 = pneg %p76
        %p250 = pneg %p73
        %p251 = pneg %p97
        %p252 = pneg %p94
        %p253 = pneg %p118
        %p254 = pneg %p115
        %p255 = pneg %p146
        %p256 = pneg %p143
        %s257 = sand.u32 %s133, 1
        %s258 = scalar_lea.sflag [#allocation5], %s257
        %s259 = sand.u32 %s133, 1
        %s260 = smul.addr %s259, 8
        %s261 = scalar_lea.vmem [#allocation9], %s260
        %p262 = scmp.eq.s32.totalorder %s27, 0
        // Predicated region
        $region49: #{tpu_custom_call.1} parent=35 // pred_check
          %p263 = pneg %p262
        $region50: #{tpu_custom_call.1} parent=35 // pred_check_branch
          %265 = sbr.rel (%p263) target = $region52
        $region51: #{tpu_custom_call.1} parent=35 // pred_region
          %v266 = vld [vmem:[%s226] sm:$0xff]
          %v267 = vld [vmem:[#allocation6] sm:$0xff]
          %v268 = vld [vmem:[#allocation6 + $0x8] sm:$0xff]
          %v269 = vld [vmem:[#allocation6 + $0x10] sm:$0xff]
          %v270 = vld [vmem:[#allocation6 + $0x18] sm:$0xff]
          %vm271 = vcmask 261120
          %v273 = vsel %vm271, %v266, 0
          %275 = vmatpush.msra.mxu0 0.0
          %276 = vmatpush.msra.mxu0 0.0
          %277 = vmatpush.msra.mxu0 0.0
          %278 = vmatpush.msra.mxu0 0.0
          %279 = vmatpush.msra.mxu0 0.0
          %280 = vmatpush.msra.mxu0 0.0
          %281 = vmatpush.msra.mxu0 0.0
          %282 = vmatpush.msra.mxu0 0.0
          %283 = vmatpush.msra.mxu0 0.0
          %284 = vmatpush.msra.mxu0 0.0
          %285 = vmatpush.msra.mxu0 0.0
          %286 = vmatpush.msra.mxu0 0.0
          %287 = vmatpush.msra.mxu0 %v270
          %288 = vmatpush.msra.mxu0 %v269
          %289 = vmatpush.msra.mxu0 %v268
          %290 = vmatpush.msra.mxu0 %v267
          %291 = vmatmul.f32.gmra.mxu0 %v273
          %v292 = vpop.f32.mrf.mxu0
          %v293 = vadd.f32 0.0, %v292
          %294 = vdwg.mxu0
          %vm295 = vcmask 523264
          %296 = vst.msk [vmem:[#allocation2] sm:$0xff] %vm295, %v293
        $region52: #{tpu_custom_call.1} parent=35 // pred_fallthru
          _
        %s297 = smul.u32 %s27, 8
        %s298 = scalar_lea.vmem %s226, %s297 [#allocation3]
        %v299 = vld [vmem:[%s298] sm:$0xff]
        %v300 = vld [vmem:[#allocation6] sm:$0xff]
        %v301 = vld [vmem:[#allocation6 + $0x8] sm:$0xff]
        %v302 = vld [vmem:[#allocation6 + $0x10] sm:$0xff]
        %v303 = vld [vmem:[#allocation6 + $0x18] sm:$0xff]
        %308 = vrot.lane.b32.xlu0 %v300, 64
        %v309 = vpop.permute.xlu0 %308
        %310 = vrot.lane.b32.xlu0 %v301, 64
        %v311 = vpop.permute.xlu0 %310
        %312 = vrot.lane.b32.xlu0 %v302, 64
        %v313 = vpop.permute.xlu0 %312
        %314 = vrot.lane.b32.xlu0 %v303, 64
        %v315 = vpop.permute.xlu0 %314
        %vm320 = vcmask 261120
        %v322 = vsel %vm320, %v299, 0
        %324 = vmatpush.msra.mxu0 0.0
        %325 = vmatpush.msra.mxu0 0.0
        %326 = vmatpush.msra.mxu0 0.0
        %327 = vmatpush.msra.mxu0 0.0
        %328 = vmatpush.msra.mxu0 0.0
        %329 = vmatpush.msra.mxu0 0.0
        %330 = vmatpush.msra.mxu0 0.0
        %331 = vmatpush.msra.mxu0 0.0
        %332 = vmatpush.msra.mxu0 0.0
        %333 = vmatpush.msra.mxu0 0.0
        %334 = vmatpush.msra.mxu0 0.0
        %335 = vmatpush.msra.mxu0 0.0
        %336 = vmatpush.msra.mxu0 %v315
        %337 = vmatpush.msra.mxu0 %v313
        %338 = vmatpush.msra.mxu0 %v311
        %339 = vmatpush.msra.mxu0 %v309
        %340 = vmatmul.f32.gmra.mxu0 %v322
        %v341 = vpop.f32.mrf.mxu0
        %v342 = vadd.f32 0.0, %v341
        %343 = vdwg.mxu0
        %v344 = vmul.f32 %v342, 0.17677669
        %v345 = vld [vmem:[#allocation2] sm:$0xff]
        %vm346 = vcmask 64512
        %v348 = vsel %vm346, %v344, 0
        %v351 = vsel %vm346, %v345, 0
        %353 = vmatpush.xpose.msra.mxu0 0.0
        %354 = vmatpush.xpose.msra.mxu0 0.0
        %355 = vmatpush.xpose.msra.mxu0 0.0
        %356 = vmatpush.xpose.msra.mxu0 0.0
        %357 = vmatpush.xpose.msra.mxu0 0.0
        %358 = vmatpush.xpose.msra.mxu0 0.0
        %359 = vmatpush.xpose.msra.mxu0 0.0
        %360 = vmatpush.xpose.msra.mxu0 0.0
        %361 = vmatpush.xpose.msra.mxu0 0.0
        %362 = vmatpush.xpose.msra.mxu0 0.0
        %363 = vmatpush.xpose.msra.mxu0 0.0
        %364 = vmatpush.xpose.msra.mxu0 0.0
        %365 = vmatpush.xpose.msra.mxu0 0.0
        %366 = vmatpush.xpose.msra.mxu0 0.0
        %367 = vmatpush.xpose.msra.mxu0 0.0
        %368 = vmatpush.xpose.msra.mxu0 %v351
        %369 = vmatmul.f32.gmra.mxu0 %v348
        %v370 = vpop.f32.mrf.mxu0
        %v371 = vadd.f32 0.0, %v370
        %372 = vdwg.mxu0
        %v373 = vsel %vm346, %v371, -inf
        %374 = vmax.xlane.f32.xlu0 %v373
        %v375 = vpop.xlane.xlu0 %374
        %v376 = vsub.f32 %v371, %v375
        %v377 = vmul.f32 %v376, 1.442695
        %v378 = vpow.pop %v377
        %v379 = vsel %vm346, %v378, 0.0
        %380 = vadd.xlane.f32.xlu0 %v379
        %v381 = vpop.xlane.xlu0 %380
        %382 = vrot.lane.b32.xlu0 %v345, 96
        %v383 = vpop.permute.xlu0 %382
        %v386 = vsel %vm346, %v378, 0
        %388 = vmatpush.msra.mxu0 0.0
        %389 = vmatpush.msra.mxu0 0.0
        %390 = vmatpush.msra.mxu0 0.0
        %391 = vmatpush.msra.mxu0 0.0
        %392 = vmatpush.msra.mxu0 0.0
        %393 = vmatpush.msra.mxu0 0.0
        %394 = vmatpush.msra.mxu0 0.0
        %395 = vmatpush.msra.mxu0 0.0
        %396 = vmatpush.msra.mxu0 0.0
        %397 = vmatpush.msra.mxu0 0.0
        %398 = vmatpush.msra.mxu0 0.0
        %399 = vmatpush.msra.mxu0 0.0
        %400 = vmatpush.msra.mxu0 0.0
        %401 = vmatpush.msra.mxu0 0.0
        %402 = vmatpush.msra.mxu0 0.0
        %403 = vmatpush.msra.mxu0 %v383
        %404 = vmatmul.f32.gmra.mxu0 %v386
        %v405 = vpop.f32.mrf.mxu0
        %v406 = vadd.f32 0.0, %v405
        %407 = vdwg.mxu0
        %v408 = vrcp.pop %v381
        %v409 = vmul.f32 %v406, %v408
        %v410 = vld [vmem:[#allocation8] sm:$0xff]
        %411 = vrot.lane.b32.xlu0 %v344, 120
        %v412 = vpop.permute.xlu0 %411
        %413 = vrot.lane.b32.xlu0 %v345, 120
        %v414 = vpop.permute.xlu0 %413
        %v415 = vsel %vm346, %v412, 0
        %v417 = vsel %vm346, %v414, 0
        %419 = vmatpush.xpose.msra.mxu0 0.0
        %420 = vmatpush.xpose.msra.mxu0 0.0
        %421 = vmatpush.xpose.msra.mxu0 0.0
        %422 = vmatpush.xpose.msra.mxu0 0.0
        %423 = vmatpush.xpose.msra.mxu0 0.0
        %424 = vmatpush.xpose.msra.mxu0 0.0
        %425 = vmatpush.xpose.msra.mxu0 0.0
        %426 = vmatpush.xpose.msra.mxu0 0.0
        %427 = vmatpush.xpose.msra.mxu0 0.0
        %428 = vmatpush.xpose.msra.mxu0 0.0
        %429 = vmatpush.xpose.msra.mxu0 0.0
        %430 = vmatpush.xpose.msra.mxu0 0.0
        %431 = vmatpush.xpose.msra.mxu0 0.0
        %432 = vmatpush.xpose.msra.mxu0 0.0
        %433 = vmatpush.xpose.msra.mxu0 0.0
        %434 = vmatpush.xpose.msra.mxu0 %v417
        %435 = vmatmul.f32.gmra.mxu0 %v415
        %v436 = vpop.f32.mrf.mxu0
        %v437 = vadd.f32 0.0, %v436
        %438 = vdwg.mxu0
        %v439 = vsel %vm346, %v437, -inf
        %440 = vmax.xlane.f32.xlu0 %v439
        %v441 = vpop.xlane.xlu0 %440
        %v442 = vsub.f32 %v437, %v441
        %v443 = vmul.f32 %v442, 1.442695
        %v444 = vpow.pop %v443
        %v445 = vsel %vm346, %v444, 0.0
        %446 = vadd.xlane.f32.xlu0 %v445
        %v447 = vpop.xlane.xlu0 %446
        %448 = vrot.lane.b32.xlu0 %v345, 88
        %v449 = vpop.permute.xlu0 %448
        %v452 = vsel %vm346, %v444, 0
        %454 = vmatpush.msra.mxu0 0.0
        %455 = vmatpush.msra.mxu0 0.0
        %456 = vmatpush.msra.mxu0 0.0
        %457 = vmatpush.msra.mxu0 0.0
        %458 = vmatpush.msra.mxu0 0.0
        %459 = vmatpush.msra.mxu0 0.0
        %460 = vmatpush.msra.mxu0 0.0
        %461 = vmatpush.msra.mxu0 0.0
        %462 = vmatpush.msra.mxu0 0.0
        %463 = vmatpush.msra.mxu0 0.0
        %464 = vmatpush.msra.mxu0 0.0
        %465 = vmatpush.msra.mxu0 0.0
        %466 = vmatpush.msra.mxu0 0.0
        %467 = vmatpush.msra.mxu0 0.0
        %468 = vmatpush.msra.mxu0 0.0
        %469 = vmatpush.msra.mxu0 %v449
        %470 = vmatmul.f32.gmra.mxu0 %v452
        %v471 = vpop.f32.mrf.mxu0
        %v472 = vadd.f32 0.0, %v471
        %473 = vdwg.mxu0
        %v474 = vrcp.pop %v447
        %v475 = vmul.f32 %v472, %v474
        %v476 = vld [vmem:[#allocation8 + $0x8] sm:$0xff]
        %v478 = vsel %vm346, %v475, 0
        %480 = vmatpush.msra.mxu0 0.0
        %481 = vmatpush.msra.mxu0 0.0
        %482 = vmatpush.msra.mxu0 0.0
        %483 = vmatpush.msra.mxu0 0.0
        %484 = vmatpush.msra.mxu0 0.0
        %485 = vmatpush.msra.mxu0 0.0
        %486 = vmatpush.msra.mxu0 0.0
        %487 = vmatpush.msra.mxu0 0.0
        %488 = vmatpush.msra.mxu0 0.0
        %489 = vmatpush.msra.mxu0 0.0
        %490 = vmatpush.msra.mxu0 0.0
        %491 = vmatpush.msra.mxu0 0.0
        %492 = vmatpush.msra.mxu0 0.0
        %493 = vmatpush.msra.mxu0 0.0
        %494 = vmatpush.msra.mxu0 0.0
        %495 = vmatpush.msra.mxu0 %v476
        %496 = vmatmul.f32.gmra.mxu0 %v478
        %v497 = vpop.f32.mrf.mxu0
        %v498 = vadd.f32 0.0, %v497
        %499 = vdwg.mxu0
        %v501 = vsel %vm346, %v409, 0
        %503 = vmatpush.msra.mxu0 0.0
        %504 = vmatpush.msra.mxu0 0.0
        %505 = vmatpush.msra.mxu0 0.0
        %506 = vmatpush.msra.mxu0 0.0
        %507 = vmatpush.msra.mxu0 0.0
        %508 = vmatpush.msra.mxu0 0.0
        %509 = vmatpush.msra.mxu0 0.0
        %510 = vmatpush.msra.mxu0 0.0
        %511 = vmatpush.msra.mxu0 0.0
        %512 = vmatpush.msra.mxu0 0.0
        %513 = vmatpush.msra.mxu0 0.0
        %514 = vmatpush.msra.mxu0 0.0
        %515 = vmatpush.msra.mxu0 0.0
        %516 = vmatpush.msra.mxu0 0.0
        %517 = vmatpush.msra.mxu0 0.0
        %518 = vmatpush.msra.mxu0 %v410
        %519 = vmatmul.f32.gmra.mxu0 %v501
        %v520 = vpop.f32.mrf.mxu0
        %v521 = vadd.f32 %v498, %v520
        %522 = vdwg.mxu0
        %523 = vrot.lane.b32.xlu0 %v344, 112
        %v524 = vpop.permute.xlu0 %523
        %525 = vrot.lane.b32.xlu0 %v345, 112
        %v526 = vpop.permute.xlu0 %525
        %v527 = vsel %vm346, %v524, 0
        %v529 = vsel %vm346, %v526, 0
        %531 = vmatpush.xpose.msra.mxu0 0.0
        %532 = vmatpush.xpose.msra.mxu0 0.0
        %533 = vmatpush.xpose.msra.mxu0 0.0
        %534 = vmatpush.xpose.msra.mxu0 0.0
        %535 = vmatpush.xpose.msra.mxu0 0.0
        %536 = vmatpush.xpose.msra.mxu0 0.0
        %537 = vmatpush.xpose.msra.mxu0 0.0
        %538 = vmatpush.xpose.msra.mxu0 0.0
        %539 = vmatpush.xpose.msra.mxu0 0.0
        %540 = vmatpush.xpose.msra.mxu0 0.0
        %541 = vmatpush.xpose.msra.mxu0 0.0
        %542 = vmatpush.xpose.msra.mxu0 0.0
        %543 = vmatpush.xpose.msra.mxu0 0.0
        %544 = vmatpush.xpose.msra.mxu0 0.0
        %545 = vmatpush.xpose.msra.mxu0 0.0
        %546 = vmatpush.xpose.msra.mxu0 %v529
        %547 = vmatmul.f32.gmra.mxu0 %v527
        %v548 = vpop.f32.mrf.mxu0
        %v549 = vadd.f32 0.0, %v548
        %550 = vdwg.mxu0
        %v551 = vsel %vm346, %v549, -inf
        %552 = vmax.xlane.f32.xlu0 %v551
        %v553 = vpop.xlane.xlu0 %552
        %v554 = vsub.f32 %v549, %v553
        %v555 = vmul.f32 %v554, 1.442695
        %v556 = vpow.pop %v555
        %v557 = vsel %vm346, %v556, 0.0
        %558 = vadd.xlane.f32.xlu0 %v557
        %v559 = vpop.xlane.xlu0 %558
        %560 = vrot.lane.b32.xlu0 %v345, 80
        %v561 = vpop.permute.xlu0 %560
        %v564 = vsel %vm346, %v556, 0
        %566 = vmatpush.msra.mxu0 0.0
        %567 = vmatpush.msra.mxu0 0.0
        %568 = vmatpush.msra.mxu0 0.0
        %569 = vmatpush.msra.mxu0 0.0
        %570 = vmatpush.msra.mxu0 0.0
        %571 = vmatpush.msra.mxu0 0.0
        %572 = vmatpush.msra.mxu0 0.0
        %573 = vmatpush.msra.mxu0 0.0
        %574 = vmatpush.msra.mxu0 0.0
        %575 = vmatpush.msra.mxu0 0.0
        %576 = vmatpush.msra.mxu0 0.0
        %577 = vmatpush.msra.mxu0 0.0
        %578 = vmatpush.msra.mxu0 0.0
        %579 = vmatpush.msra.mxu0 0.0
        %580 = vmatpush.msra.mxu0 0.0
        %581 = vmatpush.msra.mxu0 %v561
        %582 = vmatmul.f32.gmra.mxu0 %v564
        %v583 = vpop.f32.mrf.mxu0
        %v584 = vadd.f32 0.0, %v583
        %585 = vdwg.mxu0
        %v586 = vrcp.pop %v559
        %v587 = vmul.f32 %v584, %v586
        %v588 = vld [vmem:[#allocation8 + $0x10] sm:$0xff]
        %v590 = vsel %vm346, %v587, 0
        %592 = vmatpush.msra.mxu0 0.0
        %593 = vmatpush.msra.mxu0 0.0
        %594 = vmatpush.msra.mxu0 0.0
        %595 = vmatpush.msra.mxu0 0.0
        %596 = vmatpush.msra.mxu0 0.0
        %597 = vmatpush.msra.mxu0 0.0
        %598 = vmatpush.msra.mxu0 0.0
        %599 = vmatpush.msra.mxu0 0.0
        %600 = vmatpush.msra.mxu0 0.0
        %601 = vmatpush.msra.mxu0 0.0
        %602 = vmatpush.msra.mxu0 0.0
        %603 = vmatpush.msra.mxu0 0.0
        %604 = vmatpush.msra.mxu0 0.0
        %605 = vmatpush.msra.mxu0 0.0
        %606 = vmatpush.msra.mxu0 0.0
        %607 = vmatpush.msra.mxu0 %v588
        %608 = vmatmul.f32.gmra.mxu0 %v590
        %v609 = vpop.f32.mrf.mxu0
        %v610 = vadd.f32 0.0, %v609
        %611 = vdwg.mxu0
        %v612 = vadd.f32 %v521, %v610
        %613 = vrot.lane.b32.xlu0 %v344, 104
        %v614 = vpop.permute.xlu0 %613
        %615 = vrot.lane.b32.xlu0 %v345, 104
        %v616 = vpop.permute.xlu0 %615
        %v617 = vsel %vm346, %v614, 0
        %v619 = vsel %vm346, %v616, 0
        %621 = vmatpush.xpose.msra.mxu0 0.0
        %622 = vmatpush.xpose.msra.mxu0 0.0
        %623 = vmatpush.xpose.msra.mxu0 0.0
        %624 = vmatpush.xpose.msra.mxu0 0.0
        %625 = vmatpush.xpose.msra.mxu0 0.0
        %626 = vmatpush.xpose.msra.mxu0 0.0
        %627 = vmatpush.xpose.msra.mxu0 0.0
        %628 = vmatpush.xpose.msra.mxu0 0.0
        %629 = vmatpush.xpose.msra.mxu0 0.0
        %630 = vmatpush.xpose.msra.mxu0 0.0
        %631 = vmatpush.xpose.msra.mxu0 0.0
        %632 = vmatpush.xpose.msra.mxu0 0.0
        %633 = vmatpush.xpose.msra.mxu0 0.0
        %634 = vmatpush.xpose.msra.mxu0 0.0
        %635 = vmatpush.xpose.msra.mxu0 0.0
        %636 = vmatpush.xpose.msra.mxu0 %v619
        %637 = vmatmul.f32.gmra.mxu0 %v617
        %v638 = vpop.f32.mrf.mxu0
        %v639 = vadd.f32 0.0, %v638
        %640 = vdwg.mxu0
        %v641 = vsel %vm346, %v639, -inf
        %642 = vmax.xlane.f32.xlu0 %v641
        %v643 = vpop.xlane.xlu0 %642
        %v644 = vsub.f32 %v639, %v643
        %v645 = vmul.f32 %v644, 1.442695
        %v646 = vpow.pop %v645
        %v647 = vsel %vm346, %v646, 0.0
        %648 = vadd.xlane.f32.xlu0 %v647
        %v649 = vpop.xlane.xlu0 %648
        %650 = vrot.lane.b32.xlu0 %v345, 72
        %v651 = vpop.permute.xlu0 %650
        %v654 = vsel %vm346, %v646, 0
        %656 = vmatpush.msra.mxu0 0.0
        %657 = vmatpush.msra.mxu0 0.0
        %658 = vmatpush.msra.mxu0 0.0
        %659 = vmatpush.msra.mxu0 0.0
        %660 = vmatpush.msra.mxu0 0.0
        %661 = vmatpush.msra.mxu0 0.0
        %662 = vmatpush.msra.mxu0 0.0
        %663 = vmatpush.msra.mxu0 0.0
        %664 = vmatpush.msra.mxu0 0.0
        %665 = vmatpush.msra.mxu0 0.0
        %666 = vmatpush.msra.mxu0 0.0
        %667 = vmatpush.msra.mxu0 0.0
        %668 = vmatpush.msra.mxu0 0.0
        %669 = vmatpush.msra.mxu0 0.0
        %670 = vmatpush.msra.mxu0 0.0
        %671 = vmatpush.msra.mxu0 %v651
        %672 = vmatmul.f32.gmra.mxu0 %v654
        %v673 = vpop.f32.mrf.mxu0
        %v674 = vadd.f32 0.0, %v673
        %675 = vdwg.mxu0
        %v676 = vrcp.pop %v649
        %v677 = vmul.f32 %v674, %v676
        %v678 = vld [vmem:[#allocation8 + $0x18] sm:$0xff]
        %v680 = vsel %vm346, %v677, 0
        %682 = vmatpush.msra.mxu0 0.0
        %683 = vmatpush.msra.mxu0 0.0
        %684 = vmatpush.msra.mxu0 0.0
        %685 = vmatpush.msra.mxu0 0.0
        %686 = vmatpush.msra.mxu0 0.0
        %687 = vmatpush.msra.mxu0 0.0
        %688 = vmatpush.msra.mxu0 0.0
        %689 = vmatpush.msra.mxu0 0.0
        %690 = vmatpush.msra.mxu0 0.0
        %691 = vmatpush.msra.mxu0 0.0
        %692 = vmatpush.msra.mxu0 0.0
        %693 = vmatpush.msra.mxu0 0.0
        %694 = vmatpush.msra.mxu0 0.0
        %695 = vmatpush.msra.mxu0 0.0
        %696 = vmatpush.msra.mxu0 0.0
        %697 = vmatpush.msra.mxu0 %v678
        %698 = vmatmul.f32.gmra.mxu0 %v680
        %v699 = vpop.f32.mrf.mxu0
        %v700 = vadd.f32 0.0, %v699
        %701 = vdwg.mxu0
        %v702 = vadd.f32 %v612, %v700
        %v703 = vld [vmem:[%s3] sm:$0x1]
        %v705 = vperm.slane %v703, 0
        %v707 = vadd.f32 %v702, %v705
        %708 = vst.msk [vmem:[%s261] sm:$0xff] %vm320, %v707
        %s709 = sand.u32 %s133, 1
        %s710 = scalar_lea.sflag [#allocation5], %s709
        %s711 = sand.u32 %s133, 1
        %s712 = smul.addr %s711, 8
        %s713 = scalar_lea.vmem [#allocation9], %s712
        // Predicated region
        $region53: #{tpu_custom_call.1} parent=35 // pred_check
          %p714 = pneg %p143
        $region54: #{tpu_custom_call.1} parent=35 // pred_check_branch
          %716 = sbr.rel (%p714) target = $region56
        $region55: #{tpu_custom_call.1} parent=35 // pred_region
          %718 = vsyncadd %s710, 0
          %s719 = sadd.s32 %s27, %s26
          %s720 = smul.addr %s719, 8
          %s721 = scalar_lea.hbm %s4, %s720
          %s723 = sshll.u32 %s713, 4
          %s724 = int_to_ptr.vmem [resolvable:$true] %s723
          %s725 = sshll.u32 %s721, 4
          %s726 = int_to_ptr.hbm [resolvable:$true] %s725
          %728 = dma.vmem_to_hbm [thread:$0]  %s724, 128, %s726, %s710
        $region56: #{tpu_custom_call.1} parent=35 // pred_fallthru
          _
      $region36: #{tpu_custom_call.1} parent=5 // pred_fallthru
        _
      %p729 = scmp.le.s32.totalorder 2, %s17
      // Predicated region
      $region57: #{tpu_custom_call.1} parent=5 // pred_check
        %p730 = pneg %p729
      $region58: #{tpu_custom_call.1} parent=5 // pred_check_branch
        %732 = sbr.rel (%p730) target = $region60
      $region59: #{tpu_custom_call.1} parent=5 // pred_region
        %s733 = ssub.s32 %s17, 2
        // Predicated region
        $region61: #{tpu_custom_call.1} parent=59 // pred_check
          %p734 = pneg %p149
        $region62: #{tpu_custom_call.1} parent=59 // pred_check_branch
          %736 = sbr.rel (%p734) target = $region64
        $region63: #{tpu_custom_call.1} parent=59 // pred_region
          %s737 = sand.u32 %s134, 1
          %s738 = scalar_lea.sflag [#allocation5], %s737
          %s739 = sand.u32 %s134, 1
          %s740 = smul.addr %s739, 8
          %s741 = scalar_lea.vmem [#allocation9], %s740
          %743 = dma.done %s738, 128
        $region64: #{tpu_custom_call.1} parent=59 // pred_fallthru
          _
      $region60: #{tpu_custom_call.1} parent=5 // pred_fallthru
        _
    $region6: #{tpu_custom_call.1} parent=1 // loop_footer
      %s21 = sadd.s32 1, %s17
    $region7: #{tpu_custom_call.1} parent=1 // loop_footer_branch
      %16 = sbr.rel target = $region3
    $region8: #{tpu_custom_call.1} parent=1 // loop_exit
      _
    %744 = vsyncpa [#allocation4], 1
    %s745 = scalar_lea.sflag [#allocation4], 1
    %746 = vsyncpa %s745, 1
    %747 = vsyncpa [#allocation7], 1
    %748 = vsyncpa [#allocation5], 1
    %s749 = scalar_lea.sflag [#allocation5], 1
    %750 = vsyncpa %s749, 1

</llo_original>
